<compile_context>
chip_gen: v6e
topology: v6e:2x2x1
jax: 0.10.0
libtpu: 0.0.40
codegen_flags: <defaults>
</compile_context>

<pallas_src>
import jax
import jax.numpy as jnp
from jax.experimental import pallas as pl
from jax.experimental.pallas import tpu as pltpu


def _clip_ce_kernel(scale_ref, im_ref, s_ref, st_ref, it_ref, out_ref):
    """Per-row symmetric cross-entropy terms for one row block.

    im_ref : [TM, D]  row block of image embeddings
    s_ref  : [TM, D]  row block of text embeddings (same rows)
    st_ref : [D, N]   s^T  (pre-transposed in the wrapper)
    it_ref : [D, N]   im^T (pre-transposed in the wrapper)
    out_ref: [TM, 1]  lse_row(logits)[i] + lse_col(logits)[i] - 2 * logits[i, i]
    """
    scale = scale_ref[0]                      # exp(temperature), f32 scalar in SMEM

    a = im_ref[...]                           # [TM, D]
    b = s_ref[...]                            # [TM, D]

    # Row block of logits and of logits.T -- both lane-dense [TM, N] MXU tiles.
    logits_t = jnp.dot(a, st_ref[...], preferred_element_type=jnp.float32) * scale
    logits_i = jnp.dot(b, it_ref[...], preferred_element_type=jnp.float32) * scale

    # Diagonal logits[i, i] = <im[i], s[i]> * scale -- no gather needed.
    diag = jnp.sum(a.astype(jnp.float32) * b.astype(jnp.float32),
                   axis=-1, keepdims=True) * scale           # [TM, 1]

    def _lse(x):                              # numerically stable logsumexp (lanes)
        m = jnp.max(x, axis=-1, keepdims=True)
        return m + jnp.log(jnp.sum(jnp.exp(x - m), axis=-1, keepdims=True))

    # Per-row contribution: (lse_t - diag) + (lse_i - diag).
    out_ref[...] = _lse(logits_t) + _lse(logits_i) - 2.0 * diag


def cross_entropy_criterion(im, s, temperature, *, block_rows=128):
    """Forward pass of CrossEntropyCriterion. Returns a scalar f32 loss."""
    n, d = im.shape
    assert s.shape == (n, d), (im.shape, s.shape)

    tm = block_rows if n % block_rows == 0 else n     # small batch -> one block
    grid = (n // tm,)

    scale = jnp.exp(jnp.asarray(temperature, jnp.float32)).reshape((1,))
    s_t = s.T        # one-time wrapper transposes: no in-kernel XLU transpose
    im_t = im.T

    rows = pl.pallas_call(
        _clip_ce_kernel,
        out_shape=jax.ShapeDtypeStruct((n, 1), jnp.float32),
        grid=grid,
        in_specs=[
            pl.BlockSpec(memory_space=pltpu.MemorySpace.SMEM),   # exp(temperature)
            pl.BlockSpec((tm, d), lambda i: (i, 0)),             # im row block
            pl.BlockSpec((tm, d), lambda i: (i, 0)),             # s  row block
            pl.BlockSpec((d, n), lambda i: (0, 0)),              # s^T  (fetched once)
            pl.BlockSpec((d, n), lambda i: (0, 0)),              # im^T (fetched once)
        ],
        out_specs=pl.BlockSpec((tm, 1), lambda i: (i, 0)),
        compiler_params=pltpu.CompilerParams(
            dimension_semantics=("parallel",)),
    )(scale, im, s, s_t, im_t)

    # loss = (loss_i + loss_t) / 2, each a mean over n rows.
    return jnp.sum(rows[:, 0]) / jnp.float32(2 * n)


def _reference_loss(im, s, temperature):
    """Pure-JAX replica of the PyTorch forward (sanity check)."""
    scale = jnp.exp(jnp.asarray(temperature, jnp.float32)).reshape(())
    logits = jnp.dot(im, s.T) * scale
    diag = jnp.diagonal(logits)
    loss_t = jnp.mean(jax.nn.logsumexp(logits, axis=-1) - diag)  # F.cross_entropy(logits,   labels)
    loss_i = jnp.mean(jax.nn.logsumexp(logits, axis=0) - diag)   # F.cross_entropy(logits.T, labels)
    return 0.5 * (loss_i + loss_t)


if __name__ == "__main__":
    key = jax.random.PRNGKey(0)
    k_im, k_s = jax.random.split(key)

    # N paired (image, text) embeddings of width D -- TPU-tile aligned sizes.
    n, d = 256, 128
    im = jax.random.normal(k_im, (n, d), dtype=jnp.float32)
    s = jax.random.normal(k_s, (n, d), dtype=jnp.float32)
    im = im / jnp.linalg.norm(im, axis=-1, keepdims=True)
    s = s / jnp.linalg.norm(s, axis=-1, keepdims=True)
    # Snap inputs to bf16-representable values so the MXU and the XLA reference
    # matmul agree to f32 rounding regardless of default matmul precision.
    im = im.astype(jnp.bfloat16).astype(jnp.float32)
    s = s.astype(jnp.bfloat16).astype(jnp.float32)

    temperature = jnp.full((1,), 0.2, dtype=jnp.float32)   # nn.Parameter analogue

    loss_fn = jax.jit(cross_entropy_criterion)
    loss = jax.block_until_ready(loss_fn(im, s, temperature))
    ref = jax.block_until_ready(_reference_loss(im, s, temperature))

    assert jnp.isfinite(loss), f"loss is not finite: {loss}"
    assert jnp.allclose(loss, ref, rtol=1e-4, atol=1e-4), (loss, ref)
    print("KERNEL_OK")
</pallas_src>

<mosaic_0001>
module attributes {stable_mosaic.version = 11 : i64} {
  func.func @_clip_ce_kernel(%arg0: i32, %arg1: memref<1xf32, #tpu.memory_space<smem>>, %arg2: memref<128x128xf32, #tpu.memory_space<vmem>>, %arg3: memref<128x128xf32, #tpu.memory_space<vmem>>, %arg4: memref<128x256xf32, #tpu.memory_space<vmem>>, %arg5: memref<128x256xf32, #tpu.memory_space<vmem>>, %arg6: memref<128x1xf32, #tpu.memory_space<vmem>>) attributes {dimension_semantics = [#tpu.dimension_semantics<parallel>], iteration_bounds = array<i64: 2>, scalar_prefetch = 0 : i64, scratch_operands = 0 : i64, tpu.core_type = #tpu.core_type<tc>, window_params = [{transform_indices = @transform_0, window_bounds = array<i64: 1>}, {transform_indices = @transform_1, window_bounds = array<i64: 128, 128>}, {transform_indices = @transform_2, window_bounds = array<i64: 128, 128>}, {pipeline_mode = #tpu.pipeline_mode<synchronous>, transform_indices = @transform_3, window_bounds = array<i64: 128, 256>}, {pipeline_mode = #tpu.pipeline_mode<synchronous>, transform_indices = @transform_4, window_bounds = array<i64: 128, 256>}, {transform_indices = @transform_5, window_bounds = array<i64: 128, 1>}]} {
    %c0 = arith.constant 0 : index
    %0 = memref.load %arg1[%c0] : memref<1xf32, #tpu.memory_space<smem>>
    %c0_0 = arith.constant 0 : index
    %c0_1 = arith.constant 0 : index
    %1 = vector.load %arg2[%c0_0, %c0_1] : memref<128x128xf32, #tpu.memory_space<vmem>>, vector<128x128xf32>
    %c0_2 = arith.constant 0 : index
    %c0_3 = arith.constant 0 : index
    %2 = vector.load %arg3[%c0_2, %c0_3] : memref<128x128xf32, #tpu.memory_space<vmem>>, vector<128x128xf32>
    %c0_4 = arith.constant 0 : index
    %c0_5 = arith.constant 0 : index
    %3 = vector.load %arg4[%c0_4, %c0_5] : memref<128x256xf32, #tpu.memory_space<vmem>>, vector<128x256xf32>
    %cst = arith.constant dense<0.000000e+00> : vector<128x256xf32>
    %4 = tpu.matmul %1, %3, %cst {dimension_numbers = #tpu.dot_dimension_numbers<[1], [0], [0], [1], [0, 0, 1, 1], [], []>} : vector<128x128xf32>, vector<128x256xf32>, vector<128x256xf32> -> vector<128x256xf32>
    %5 = vector.broadcast %0 : f32 to vector<128x256xf32>
    %6 = arith.mulf %4, %5 : vector<128x256xf32>
    %c0_6 = arith.constant 0 : index
    %c0_7 = arith.constant 0 : index
    %7 = vector.load %arg5[%c0_6, %c0_7] : memref<128x256xf32, #tpu.memory_space<vmem>>, vector<128x256xf32>
    %cst_8 = arith.constant dense<0.000000e+00> : vector<128x256xf32>
    %8 = tpu.matmul %2, %7, %cst_8 {dimension_numbers = #tpu.dot_dimension_numbers<[1], [0], [0], [1], [0, 0, 1, 1], [], []>} : vector<128x128xf32>, vector<128x256xf32>, vector<128x256xf32> -> vector<128x256xf32>
    %9 = vector.broadcast %0 : f32 to vector<128x256xf32>
    %10 = arith.mulf %8, %9 : vector<128x256xf32>
    %11 = arith.mulf %1, %2 : vector<128x128xf32>
    %cst_9 = arith.constant dense<0.000000e+00> : vector<128xf32>
    %12 = vector.multi_reduction <add>, %11, %cst_9 [1] : vector<128x128xf32> to vector<128xf32>
    %13 = vector.shape_cast %12 : vector<128xf32> to vector<128x1xf32>
    %14 = vector.broadcast %0 : f32 to vector<128x1xf32>
    %15 = arith.mulf %13, %14 : vector<128x1xf32>
    %cst_10 = arith.constant dense<0xFF800000> : vector<128xf32>
    %16 = vector.multi_reduction <maximumf>, %6, %cst_10 [1] : vector<128x256xf32> to vector<128xf32>
    %17 = vector.shape_cast %16 : vector<128xf32> to vector<128x1xf32>
    %18 = vector.broadcast %17 : vector<128x1xf32> to vector<128x256xf32>
    %19 = arith.subf %6, %18 : vector<128x256xf32>
    %20 = math.exp %19 : vector<128x256xf32>
    %cst_11 = arith.constant dense<0.000000e+00> : vector<128xf32>
    %21 = vector.multi_reduction <add>, %20, %cst_11 [1] : vector<128x256xf32> to vector<128xf32>
    %22 = vector.shape_cast %21 : vector<128xf32> to vector<128x1xf32>
    %23 = math.log %22 : vector<128x1xf32>
    %24 = arith.addf %17, %23 : vector<128x1xf32>
    %cst_12 = arith.constant dense<0xFF800000> : vector<128xf32>
    %25 = vector.multi_reduction <maximumf>, %10, %cst_12 [1] : vector<128x256xf32> to vector<128xf32>
    %26 = vector.shape_cast %25 : vector<128xf32> to vector<128x1xf32>
    %27 = vector.broadcast %26 : vector<128x1xf32> to vector<128x256xf32>
    %28 = arith.subf %10, %27 : vector<128x256xf32>
    %29 = math.exp %28 : vector<128x256xf32>
    %cst_13 = arith.constant dense<0.000000e+00> : vector<128xf32>
    %30 = vector.multi_reduction <add>, %29, %cst_13 [1] : vector<128x256xf32> to vector<128xf32>
    %31 = vector.shape_cast %30 : vector<128xf32> to vector<128x1xf32>
    %32 = math.log %31 : vector<128x1xf32>
    %33 = arith.addf %26, %32 : vector<128x1xf32>
    %34 = arith.addf %24, %33 : vector<128x1xf32>
    %cst_14 = arith.constant 2.000000e+00 : f32
    %35 = vector.broadcast %cst_14 : f32 to vector<128x1xf32>
    %36 = arith.mulf %35, %15 : vector<128x1xf32>
    %37 = arith.subf %34, %36 : vector<128x1xf32>
    %c0_15 = arith.constant 0 : index
    %c0_16 = arith.constant 0 : index
    %38 = vector.load %arg6[%c0_15, %c0_16] : memref<128x1xf32, #tpu.memory_space<vmem>>, vector<128x1xf32>
    tpu.vector_store %arg6[%c0_15, %c0_16], %37 {strides = array<i32>} : memref<128x1xf32, #tpu.memory_space<vmem>>, vector<128x1xf32>,
    return
  }
  func.func @transform_0(%arg0: i32) -> i32 {
    %c0_i32 = arith.constant 0 : i32
    %c0_i32_0 = arith.constant 0 : i32
    return %c0_i32 : i32
  }
  func.func @transform_1(%arg0: i32) -> (i32, i32) {
    %c0_i32 = arith.constant 0 : i32
    %c0_i32_0 = arith.constant 0 : i32
    return %arg0, %c0_i32 : i32, i32
  }
  func.func @transform_2(%arg0: i32) -> (i32, i32) {
    %c0_i32 = arith.constant 0 : i32
    %c0_i32_0 = arith.constant 0 : i32
    return %arg0, %c0_i32 : i32, i32
  }
  func.func @transform_3(%arg0: i32) -> (i32, i32) {
    %c0_i32 = arith.constant 0 : i32
    %c0_i32_0 = arith.constant 0 : i32
    %c0_i32_1 = arith.constant 0 : i32
    return %c0_i32, %c0_i32_0 : i32, i32
  }
  func.func @transform_4(%arg0: i32) -> (i32, i32) {
    %c0_i32 = arith.constant 0 : i32
    %c0_i32_0 = arith.constant 0 : i32
    %c0_i32_1 = arith.constant 0 : i32
    return %c0_i32, %c0_i32_0 : i32, i32
  }
  func.func @transform_5(%arg0: i32) -> (i32, i32) {
    %c0_i32 = arith.constant 0 : i32
    %c0_i32_0 = arith.constant 0 : i32
    return %arg0, %c0_i32 : i32, i32
  }
}

</mosaic_0001>

<llo_original>
// kernel: cross_entropy_criterion.1
$region0: #{cross_entropy_criterion.1}
  #allocation0 [shape = 'u32[]', space=smem, size = 0x4, offset = 0x4, fixed_abs, tag = 'smem constant byte address 0x4 - core index']
  #allocation1 [shape = 'u32[144,128]{1,0:T(1,128)}', space=vmem, size = 0x12000, scoped, tag = 'internal scratch']
  #allocation2 [shape = 'f32[1]{0:T(128)S(6)}', space=smem, size = 0x200, scoped, tag = 'scoped memory for cross_entropy_criterion.1']
  %s0 = inlined_call_operand.<no memory space> [shape: f32[1], index: 0, kind: input, shape index: {}]
  %s1 = inlined_call_operand.vmem [shape: f32[256,128], index: 1, kind: input, shape index: {}]
  %s2 = inlined_call_operand.vmem [shape: f32[256,128], index: 2, kind: input, shape index: {}]
  %s3 = inlined_call_operand.vmem [shape: f32[128,256], index: 3, kind: input, shape index: {}]
  %s4 = inlined_call_operand.vmem [shape: f32[128,256], index: 4, kind: input, shape index: {}]
  %s5 = inlined_call_operand.vmem [shape: f32[256,1], index: 5, kind: output, shape index: {}]
  %s6 = sld [smem:[#allocation0]]
  $region53: #{cross_entropy_criterion.1} parent=0
    _
  %s8 = ssub.s32 1, %s6
  %s9 = scalar_select 0, %s8, %s6
  %10 = sst [smem:[#allocation2]] %s0
  loop: start=0, step=1, limit=4
  $region2: #{cross_entropy_criterion.1} parent=0 // loop_pre_header
    _
  $region3: #{cross_entropy_criterion.1} parent=0 // loop_header
    %s12 = sphi 0, %s16
    %p13 = scmp.ge.s32.totalorder %s12, 4
    %s20 = sphi 0, %s20
    %s22 = sphi 0, %s20
    %s23 = sphi 0, %s22
    %s37 = sphi 0, %s23
    %s43 = sphi 0, %s45
    %s46 = sphi 0, %s43
    %s47 = sphi 0, %s46
    %s63 = sphi 0, %s47
    %s69 = sphi 0, %s71
    %s72 = sphi 0, %s69
    %s73 = sphi 0, %s72
    %s89 = sphi 0, %s73
    %s93 = sphi 0, %s93
    %s95 = sphi 0, %s93
    %s96 = sphi 0, %s95
    %s110 = sphi 0, %s96
    %s114 = sphi 0, %s114
    %s116 = sphi 0, %s114
    %s117 = sphi 0, %s116
    %s131 = sphi 0, %s117
    %s137 = sphi 0, %s139
    %s140 = sphi 0, %s137
    %s141 = sphi 0, %s140
    %s157 = sphi 0, %s141
  $region4: #{cross_entropy_criterion.1} parent=0 // loop_header_branch
    %15 = sbr.rel (%p13) target = $region8
  $region5: #{cross_entropy_criterion.1} parent=0 // loop_body
    %s17 = ssub.s32 %s12, 1
    %s18 = ssub.s32 %s12, 2
    %s19 = sadd.s32 %s12, 1
    %s21 = sadd.s32 %s20, 1
    %p24 = scmp.eq.s32.totalorder %s12, 1
    %p25 = scmp.ne.s32.totalorder %s20, %s22
    %p26 = scmp.eq.s32.totalorder %s12, 0
    %p27 = por %p25, %p26
    %p28 = scmp.ne.s32.totalorder %s20, %s22
    %p29 = scmp.eq.s32.totalorder %s17, 1
    %p30 = por %p28, %p29
    %p31 = scmp.ne.s32.totalorder %s22, %s23
    %p32 = scmp.eq.s32.totalorder %s17, 0
    %p33 = por %p31, %p32
    %p34 = scmp.ne.s32.totalorder %s22, %s23
    %p35 = scmp.eq.s32.totalorder %s18, 1
    %p36 = por %p34, %p35
    %p38 = scmp.ne.s32.totalorder %s23, %s37
    %p39 = scmp.eq.s32.totalorder %s18, 0
    %p40 = por %p38, %p39
    %s41 = ssub.s32 %s12, %s19
    %p42 = scmp.eq.s32.totalorder %s41, 0
    %s44 = sadd.s32 %s43, 1
    %s45 = scalar_select %p42, %s43, %s44
    %p48 = pneg %p42
    %p49 = scmp.eq.s32.totalorder %s12, 1
    %p50 = por %p48, %p49
    %p51 = scmp.ne.s32.totalorder %s43, %s46
    %p52 = scmp.eq.s32.totalorder %s12, 0
    %p53 = por %p51, %p52
    %p54 = scmp.ne.s32.totalorder %s43, %s46
    %p55 = scmp.eq.s32.totalorder %s17, 1
    %p56 = por %p54, %p55
    %p57 = scmp.ne.s32.totalorder %s46, %s47
    %p58 = scmp.eq.s32.totalorder %s17, 0
    %p59 = por %p57, %p58
    %p60 = scmp.ne.s32.totalorder %s46, %s47
    %p61 = scmp.eq.s32.totalorder %s18, 1
    %p62 = por %p60, %p61
    %p64 = scmp.ne.s32.totalorder %s47, %s63
    %p65 = scmp.eq.s32.totalorder %s18, 0
    %p66 = por %p64, %p65
    %s67 = ssub.s32 %s12, %s19
    %p68 = scmp.eq.s32.totalorder %s67, 0
    %s70 = sadd.s32 %s69, 1
    %s71 = scalar_select %p68, %s69, %s70
    %p74 = pneg %p68
    %p75 = scmp.eq.s32.totalorder %s12, 1
    %p76 = por %p74, %p75
    %p77 = scmp.ne.s32.totalorder %s69, %s72
    %p78 = scmp.eq.s32.totalorder %s12, 0
    %p79 = por %p77, %p78
    %p80 = scmp.ne.s32.totalorder %s69, %s72
    %p81 = scmp.eq.s32.totalorder %s17, 1
    %p82 = por %p80, %p81
    %p83 = scmp.ne.s32.totalorder %s72, %s73
    %p84 = scmp.eq.s32.totalorder %s17, 0
    %p85 = por %p83, %p84
    %p86 = scmp.ne.s32.totalorder %s72, %s73
    %p87 = scmp.eq.s32.totalorder %s18, 1
    %p88 = por %p86, %p87
    %p90 = scmp.ne.s32.totalorder %s73, %s89
    %p91 = scmp.eq.s32.totalorder %s18, 0
    %p92 = por %p90, %p91
    %s94 = sadd.s32 %s93, 1
    %p97 = scmp.eq.s32.totalorder %s12, 1
    %p98 = scmp.ne.s32.totalorder %s93, %s95
    %p99 = scmp.eq.s32.totalorder %s12, 0
    %p100 = por %p98, %p99
    %p101 = scmp.ne.s32.totalorder %s93, %s95
    %p102 = scmp.eq.s32.totalorder %s17, 1
    %p103 = por %p101, %p102
    %p104 = scmp.ne.s32.totalorder %s95, %s96
    %p105 = scmp.eq.s32.totalorder %s17, 0
    %p106 = por %p104, %p105
    %p107 = scmp.ne.s32.totalorder %s95, %s96
    %p108 = scmp.eq.s32.totalorder %s18, 1
    %p109 = por %p107, %p108
    %p111 = scmp.ne.s32.totalorder %s96, %s110
    %p112 = scmp.eq.s32.totalorder %s18, 0
    %p113 = por %p111, %p112
    %s115 = sadd.s32 %s114, 1
    %p118 = scmp.eq.s32.totalorder %s12, 1
    %p119 = scmp.ne.s32.totalorder %s114, %s116
    %p120 = scmp.eq.s32.totalorder %s12, 0
    %p121 = por %p119, %p120
    %p122 = scmp.ne.s32.totalorder %s114, %s116
    %p123 = scmp.eq.s32.totalorder %s17, 1
    %p124 = por %p122, %p123
    %p125 = scmp.ne.s32.totalorder %s116, %s117
    %p126 = scmp.eq.s32.totalorder %s17, 0
    %p127 = por %p125, %p126
    %p128 = scmp.ne.s32.totalorder %s116, %s117
    %p129 = scmp.eq.s32.totalorder %s18, 1
    %p130 = por %p128, %p129
    %p132 = scmp.ne.s32.totalorder %s117, %s131
    %p133 = scmp.eq.s32.totalorder %s18, 0
    %p134 = por %p132, %p133
    %s135 = ssub.s32 %s12, %s19
    %p136 = scmp.eq.s32.totalorder %s135, 0
    %s138 = sadd.s32 %s137, 1
    %s139 = scalar_select %p136, %s137, %s138
    %p142 = pneg %p136
    %p143 = scmp.eq.s32.totalorder %s12, 1
    %p144 = por %p142, %p143
    %p145 = scmp.ne.s32.totalorder %s137, %s140
    %p146 = scmp.eq.s32.totalorder %s12, 0
    %p147 = por %p145, %p146
    %p148 = scmp.ne.s32.totalorder %s137, %s140
    %p149 = scmp.eq.s32.totalorder %s17, 1
    %p150 = por %p148, %p149
    %p151 = scmp.ne.s32.totalorder %s140, %s141
    %p152 = scmp.eq.s32.totalorder %s17, 0
    %p153 = por %p151, %p152
    %p154 = scmp.ne.s32.totalorder %s140, %s141
    %p155 = scmp.eq.s32.totalorder %s18, 1
    %p156 = por %p154, %p155
    %p158 = scmp.ne.s32.totalorder %s141, %s157
    %p159 = scmp.eq.s32.totalorder %s18, 0
    %p160 = por %p158, %p159
    %p161 = scmp.le.s32.totalorder 1, %s12
    %p162 = scmp.lt.s32.totalorder %s12, 3
    %p163 = pnand %p161, %p162
    %p164 = pneg %p163
    // Predicated region
    $region9: #{cross_entropy_criterion.1} parent=5 // pred_check
      _
    $region10: #{cross_entropy_criterion.1} parent=5 // pred_check_branch
      %166 = sbr.rel (%p163) target = $region12
    $region11: #{cross_entropy_criterion.1} parent=5 // pred_region
      %s167 = ssub.s32 %s12, 1
      // Predicated region
      $region13: #{cross_entropy_criterion.1} parent=11 // pred_check
        %p168 = pneg %p33
      $region14: #{cross_entropy_criterion.1} parent=11 // pred_check_branch
        %170 = sbr.rel (%p168) target = $region16
      $region15: #{cross_entropy_criterion.1} parent=11 // pred_region
        _
      $region16: #{cross_entropy_criterion.1} parent=11 // pred_fallthru
        _
      // Predicated region
      $region17: #{cross_entropy_criterion.1} parent=11 // pred_check
        %p171 = pneg %p106
      $region18: #{cross_entropy_criterion.1} parent=11 // pred_check_branch
        %173 = sbr.rel (%p171) target = $region20
      $region19: #{cross_entropy_criterion.1} parent=11 // pred_region
        _
      $region20: #{cross_entropy_criterion.1} parent=11 // pred_fallthru
        _
      // Predicated region
      $region21: #{cross_entropy_criterion.1} parent=11 // pred_check
        %p174 = pneg %p127
      $region22: #{cross_entropy_criterion.1} parent=11 // pred_check_branch
        %176 = sbr.rel (%p174) target = $region24
      $region23: #{cross_entropy_criterion.1} parent=11 // pred_region
        _
      $region24: #{cross_entropy_criterion.1} parent=11 // pred_fallthru
        _
    $region12: #{cross_entropy_criterion.1} parent=5 // pred_fallthru
      _
    %p177 = scmp.lt.s32.totalorder %s12, 2
    // Predicated region
    $region25: #{cross_entropy_criterion.1} parent=5 // pred_check
      %p178 = pneg %p177
    $region26: #{cross_entropy_criterion.1} parent=5 // pred_check_branch
      %180 = sbr.rel (%p178) target = $region28
    $region27: #{cross_entropy_criterion.1} parent=5 // pred_region
      // Predicated region
      $region29: #{cross_entropy_criterion.1} parent=27 // pred_check
        %p181 = pneg %p53
      $region30: #{cross_entropy_criterion.1} parent=27 // pred_check_branch
        %183 = sbr.rel (%p181) target = $region32
      $region31: #{cross_entropy_criterion.1} parent=27 // pred_region
        %s184 = smul.u32 16, %s12
        %p185 = scmp.lt.s32.totalorder %s184, 31
        %s186 = scalar_select %p185, %s184, 31
        %s187 = smul.addr %s186, 8
        %s188 = scalar_lea.vmem %s1, %s187
        %s189 = smul.u32 16, %s12
      $region32: #{cross_entropy_criterion.1} parent=27 // pred_fallthru
        _
      // Predicated region
      $region33: #{cross_entropy_criterion.1} parent=27 // pred_check
        %p190 = pneg %p79
      $region34: #{cross_entropy_criterion.1} parent=27 // pred_check_branch
        %192 = sbr.rel (%p190) target = $region36
      $region35: #{cross_entropy_criterion.1} parent=27 // pred_region
        %s193 = smul.u32 16, %s12
        %p194 = scmp.lt.s32.totalorder %s193, 31
        %s195 = scalar_select %p194, %s193, 31
        %s196 = smul.addr %s195, 8
        %s197 = scalar_lea.vmem %s2, %s196
        %s198 = smul.u32 16, %s12
      $region36: #{cross_entropy_criterion.1} parent=27 // pred_fallthru
        _
    $region28: #{cross_entropy_criterion.1} parent=5 // pred_fallthru
      _
    %p199 = scmp.le.s32.totalorder 1, %s12
    %p200 = scmp.lt.s32.totalorder %s12, 3
    %p201 = pnand %p199, %p200
    %p202 = pneg %p201
    // Predicated region
    $region37: #{cross_entropy_criterion.1} parent=5 // pred_check
      _
    $region38: #{cross_entropy_criterion.1} parent=5 // pred_check_branch
      %204 = sbr.rel (%p201) target = $region40
    $region39: #{cross_entropy_criterion.1} parent=5 // pred_region
      %s205 = ssub.s32 %s12, 1
      %p206 = pneg %p33
      %p207 = pneg %p30
      %s208 = smul.u32 16, %s17
      %p209 = scmp.lt.s32.totalorder %s208, 31
      %s210 = scalar_select %p209, %s208, 31
      %s211 = smul.addr %s210, 8
      %s212 = scalar_lea.vmem %s1, %s211
      %p213 = pneg %p59
      %p214 = pneg %p56
      %s215 = smul.u32 16, %s17
      %p216 = scmp.lt.s32.totalorder %s215, 31
      %s217 = scalar_select %p216, %s215, 31
      %s218 = smul.addr %s217, 8
      %s219 = scalar_lea.vmem %s2, %s218
      %p220 = pneg %p85
      %p221 = pneg %p82
      %p222 = pneg %p106
      %p223 = pneg %p103
      %p224 = pneg %p127
      %p225 = pneg %p124
      %p226 = pneg %p153
      %p227 = pneg %p150
      %s228 = smul.u32 16, %s17
      %p229 = scmp.lt.s32.totalorder %s228, 31
      %s230 = scalar_select %p229, %s228, 31
      %s231 = smul.addr %s230, 8
      %s232 = scalar_lea.vmem %s5, %s231
      %s233 = smul.u32 16, %s17
      %p234 = scmp.lt.s32.totalorder %s233, 31
      %s235 = scalar_select %p234, %s233, 31
      %s236 = smul.addr %s235, 8
      %s237 = scalar_lea.vmem %s1, %s236
      %s238 = smul.u32 16, %s17
      %s239 = smul.u32 16, %s17
      %p240 = scmp.lt.s32.totalorder %s239, 31
      %s241 = scalar_select %p240, %s239, 31
      %s242 = smul.addr %s241, 8
      %s243 = scalar_lea.vmem %s2, %s242
      %s244 = smul.u32 16, %s17
      %s245 = smul.u32 16, %s17
      %p246 = scmp.lt.s32.totalorder %s245, 31
      %s247 = scalar_select %p246, %s245, 31
      %s248 = smul.addr %s247, 8
      %s249 = scalar_lea.vmem %s5, %s248
      %s250 = smul.u32 16, %s17
      %s251 = sld [smem:[#allocation2]]
      %v252 = vld [vmem:[%s237] sm:$0xff]
      %v253 = vld [vmem:[%s237 + $0x8] sm:$0xff]
      %v254 = vld [vmem:[%s237 + $0x10] sm:$0xff]
      %v255 = vld [vmem:[%s237 + $0x18] sm:$0xff]
      %v256 = vld [vmem:[%s237 + $0x20] sm:$0xff]
      %v257 = vld [vmem:[%s237 + $0x28] sm:$0xff]
      %v258 = vld [vmem:[%s237 + $0x30] sm:$0xff]
      %v259 = vld [vmem:[%s237 + $0x38] sm:$0xff]
      %v260 = vld [vmem:[%s237 + $0x40] sm:$0xff]
      %v261 = vld [vmem:[%s237 + $0x48] sm:$0xff]
      %v262 = vld [vmem:[%s237 + $0x50] sm:$0xff]
      %v263 = vld [vmem:[%s237 + $0x58] sm:$0xff]
      %v264 = vld [vmem:[%s237 + $0x60] sm:$0xff]
      %v265 = vld [vmem:[%s237 + $0x68] sm:$0xff]
      %v266 = vld [vmem:[%s237 + $0x70] sm:$0xff]
      %v267 = vld [vmem:[%s237 + $0x78] sm:$0xff]
      %v268 = vld [vmem:[%s243] sm:$0xff]
      %v269 = vld [vmem:[%s243 + $0x8] sm:$0xff]
      %v270 = vld [vmem:[%s243 + $0x10] sm:$0xff]
      %v271 = vld [vmem:[%s243 + $0x18] sm:$0xff]
      %v272 = vld [vmem:[%s243 + $0x20] sm:$0xff]
      %v273 = vld [vmem:[%s243 + $0x28] sm:$0xff]
      %v274 = vld [vmem:[%s243 + $0x30] sm:$0xff]
      %v275 = vld [vmem:[%s243 + $0x38] sm:$0xff]
      %v276 = vld [vmem:[%s243 + $0x40] sm:$0xff]
      %v277 = vld [vmem:[%s243 + $0x48] sm:$0xff]
      %v278 = vld [vmem:[%s243 + $0x50] sm:$0xff]
      %v279 = vld [vmem:[%s243 + $0x58] sm:$0xff]
      %v280 = vld [vmem:[%s243 + $0x60] sm:$0xff]
      %v281 = vld [vmem:[%s243 + $0x68] sm:$0xff]
      %v282 = vld [vmem:[%s243 + $0x70] sm:$0xff]
      %v283 = vld [vmem:[%s243 + $0x78] sm:$0xff]
      %v284 = vld [vmem:[%s3] sm:$0xff]
      %v285 = vld [vmem:[%s3 + $0x8] sm:$0xff]
      %v286 = vld [vmem:[%s3 + $0x10] sm:$0xff]
      %v287 = vld [vmem:[%s3 + $0x18] sm:$0xff]
      %v288 = vld [vmem:[%s3 + $0x20] sm:$0xff]
      %v289 = vld [vmem:[%s3 + $0x28] sm:$0xff]
      %v290 = vld [vmem:[%s3 + $0x30] sm:$0xff]
      %v291 = vld [vmem:[%s3 + $0x38] sm:$0xff]
      %v292 = vld [vmem:[%s3 + $0x40] sm:$0xff]
      %v293 = vld [vmem:[%s3 + $0x48] sm:$0xff]
      %v294 = vld [vmem:[%s3 + $0x50] sm:$0xff]
      %v295 = vld [vmem:[%s3 + $0x58] sm:$0xff]
      %v296 = vld [vmem:[%s3 + $0x60] sm:$0xff]
      %v297 = vld [vmem:[%s3 + $0x68] sm:$0xff]
      %v298 = vld [vmem:[%s3 + $0x70] sm:$0xff]
      %v299 = vld [vmem:[%s3 + $0x78] sm:$0xff]
      %v300 = vld [vmem:[%s3 + $0x80] sm:$0xff]
      %v301 = vld [vmem:[%s3 + $0x88] sm:$0xff]
      %v302 = vld [vmem:[%s3 + $0x90] sm:$0xff]
      %v303 = vld [vmem:[%s3 + $0x98] sm:$0xff]
      %v304 = vld [vmem:[%s3 + $0xa0] sm:$0xff]
      %v305 = vld [vmem:[%s3 + $0xa8] sm:$0xff]
      %v306 = vld [vmem:[%s3 + $0xb0] sm:$0xff]
      %v307 = vld [vmem:[%s3 + $0xb8] sm:$0xff]
      %v308 = vld [vmem:[%s3 + $0xc0] sm:$0xff]
      %v309 = vld [vmem:[%s3 + $0xc8] sm:$0xff]
      %v310 = vld [vmem:[%s3 + $0xd0] sm:$0xff]
      %v311 = vld [vmem:[%s3 + $0xd8] sm:$0xff]
      %v312 = vld [vmem:[%s3 + $0xe0] sm:$0xff]
      %v313 = vld [vmem:[%s3 + $0xe8] sm:$0xff]
      %v314 = vld [vmem:[%s3 + $0xf0] sm:$0xff]
      %v315 = vld [vmem:[%s3 + $0xf8] sm:$0xff]
      %316 = vmatprep.subr.mxu0 %v315
      %317 = vmatpush1.msra.mxu0 %v314
      %318 = vmatprep.subr.mxu0 %v313
      %319 = vmatpush1.msra.mxu0 %v312
      %320 = vmatprep.subr.mxu0 %v311
      %321 = vmatpush1.msra.mxu0 %v310
      %322 = vmatprep.subr.mxu0 %v309
      %323 = vmatpush1.msra.mxu0 %v308
      %324 = vmatprep.subr.mxu0 %v307
      %325 = vmatpush1.msra.mxu0 %v306
      %326 = vmatprep.subr.mxu0 %v305
      %327 = vmatpush1.msra.mxu0 %v304
      %328 = vmatprep.subr.mxu0 %v303
      %329 = vmatpush1.msra.mxu0 %v302
      %330 = vmatprep.subr.mxu0 %v301
      %331 = vmatpush1.msra.mxu0 %v300
      %332 = vmatprep.subr.mxu0 %v299
      %333 = vmatpush1.msra.mxu0 %v298
      %334 = vmatprep.subr.mxu0 %v297
      %335 = vmatpush1.msra.mxu0 %v296
      %336 = vmatprep.subr.mxu0 %v295
      %337 = vmatpush1.msra.mxu0 %v294
      %338 = vmatprep.subr.mxu0 %v293
      %339 = vmatpush1.msra.mxu0 %v292
      %340 = vmatprep.subr.mxu0 %v291
      %341 = vmatpush1.msra.mxu0 %v290
      %342 = vmatprep.subr.mxu0 %v289
      %343 = vmatpush1.msra.mxu0 %v288
      %344 = vmatprep.subr.mxu0 %v287
      %345 = vmatpush1.msra.mxu0 %v286
      %346 = vmatprep.subr.mxu0 %v285
      %347 = vmatpush1.msra.mxu0 %v284
      %348 = vmatprep.subr.mxu0 0.0
      %349 = vmatpush2.msra.mxu0 0.0
      %350 = vmatprep.subr.mxu0 0.0
      %351 = vmatpush2.msra.mxu0 0.0
      %352 = vmatprep.subr.mxu0 0.0
      %353 = vmatpush2.msra.mxu0 0.0
      %354 = vmatprep.subr.mxu0 0.0
      %355 = vmatpush2.msra.mxu0 0.0
      %356 = vmatprep.subr.mxu0 0.0
      %357 = vmatpush2.msra.mxu0 0.0
      %358 = vmatprep.subr.mxu0 0.0
      %359 = vmatpush2.msra.mxu0 0.0
      %360 = vmatprep.subr.mxu0 0.0
      %361 = vmatpush2.msra.mxu0 0.0
      %362 = vmatprep.subr.mxu0 0.0
      %363 = vmatpush2.msra.mxu0 0.0
      %364 = vmatprep.subr.mxu0 0.0
      %365 = vmatpush2.msra.mxu0 0.0
      %366 = vmatprep.subr.mxu0 0.0
      %367 = vmatpush2.msra.mxu0 0.0
      %368 = vmatprep.subr.mxu0 0.0
      %369 = vmatpush2.msra.mxu0 0.0
      %370 = vmatprep.subr.mxu0 0.0
      %371 = vmatpush2.msra.mxu0 0.0
      %372 = vmatprep.subr.mxu0 0.0
      %373 = vmatpush2.msra.mxu0 0.0
      %374 = vmatprep.subr.mxu0 0.0
      %375 = vmatpush2.msra.mxu0 0.0
      %376 = vmatprep.subr.mxu0 0.0
      %377 = vmatpush2.msra.mxu0 0.0
      %378 = vmatprep.subr.mxu0 0.0
      %379 = vmatpush2.msra.mxu0 0.0
      %380 = vmatprep.mubr.f32.mxu0 0.0
      %381 = vmatmul.mubr.f32.gmra.mxu0 %v252
      %v382 = vpop.f32.mrf.mxu0
      %v383 = vadd.f32 0.0, %v382
      %v384 = vpop.f32.mrf.mxu0
      %v385 = vadd.f32 0.0, %v384
      %386 = vmatprep.mubr.f32.mxu0 0.0
      %387 = vmatmul.mubr.f32.gmra.mxu0 %v253
      %v388 = vpop.f32.mrf.mxu0
      %v389 = vadd.f32 0.0, %v388
      %v390 = vpop.f32.mrf.mxu0
      %v391 = vadd.f32 0.0, %v390
      %392 = vmatprep.mubr.f32.mxu0 0.0
      %393 = vmatmul.mubr.f32.gmra.mxu0 %v254
      %v394 = vpop.f32.mrf.mxu0
      %v395 = vadd.f32 0.0, %v394
      %v396 = vpop.f32.mrf.mxu0
      %v397 = vadd.f32 0.0, %v396
      %398 = vmatprep.mubr.f32.mxu0 0.0
      %399 = vmatmul.mubr.f32.gmra.mxu0 %v255
      %v400 = vpop.f32.mrf.mxu0
      %v401 = vadd.f32 0.0, %v400
      %v402 = vpop.f32.mrf.mxu0
      %v403 = vadd.f32 0.0, %v402
      %404 = vmatprep.mubr.f32.mxu0 0.0
      %405 = vmatmul.mubr.f32.gmra.mxu0 %v256
      %v406 = vpop.f32.mrf.mxu0
      %v407 = vadd.f32 0.0, %v406
      %v408 = vpop.f32.mrf.mxu0
      %v409 = vadd.f32 0.0, %v408
      %410 = vmatprep.mubr.f32.mxu0 0.0
      %411 = vmatmul.mubr.f32.gmra.mxu0 %v257
      %v412 = vpop.f32.mrf.mxu0
      %v413 = vadd.f32 0.0, %v412
      %v414 = vpop.f32.mrf.mxu0
      %v415 = vadd.f32 0.0, %v414
      %416 = vmatprep.mubr.f32.mxu0 0.0
      %417 = vmatmul.mubr.f32.gmra.mxu0 %v258
      %v418 = vpop.f32.mrf.mxu0
      %v419 = vadd.f32 0.0, %v418
      %v420 = vpop.f32.mrf.mxu0
      %v421 = vadd.f32 0.0, %v420
      %422 = vmatprep.mubr.f32.mxu0 0.0
      %423 = vmatmul.mubr.f32.gmra.mxu0 %v259
      %v424 = vpop.f32.mrf.mxu0
      %v425 = vadd.f32 0.0, %v424
      %v426 = vpop.f32.mrf.mxu0
      %v427 = vadd.f32 0.0, %v426
      %428 = vmatprep.mubr.f32.mxu0 0.0
      %429 = vmatmul.mubr.f32.gmra.mxu0 %v260
      %v430 = vpop.f32.mrf.mxu0
      %v431 = vadd.f32 0.0, %v430
      %v432 = vpop.f32.mrf.mxu0
      %v433 = vadd.f32 0.0, %v432
      %434 = vmatprep.mubr.f32.mxu0 0.0
      %435 = vmatmul.mubr.f32.gmra.mxu0 %v261
      %v436 = vpop.f32.mrf.mxu0
      %v437 = vadd.f32 0.0, %v436
      %v438 = vpop.f32.mrf.mxu0
      %v439 = vadd.f32 0.0, %v438
      %440 = vmatprep.mubr.f32.mxu0 0.0
      %441 = vmatmul.mubr.f32.gmra.mxu0 %v262
      %v442 = vpop.f32.mrf.mxu0
      %v443 = vadd.f32 0.0, %v442
      %v444 = vpop.f32.mrf.mxu0
      %v445 = vadd.f32 0.0, %v444
      %446 = vmatprep.mubr.f32.mxu0 0.0
      %447 = vmatmul.mubr.f32.gmra.mxu0 %v263
      %v448 = vpop.f32.mrf.mxu0
      %v449 = vadd.f32 0.0, %v448
      %v450 = vpop.f32.mrf.mxu0
      %v451 = vadd.f32 0.0, %v450
      %452 = vmatprep.mubr.f32.mxu0 0.0
      %453 = vmatmul.mubr.f32.gmra.mxu0 %v264
      %v454 = vpop.f32.mrf.mxu0
      %v455 = vadd.f32 0.0, %v454
      %v456 = vpop.f32.mrf.mxu0
      %v457 = vadd.f32 0.0, %v456
      %458 = vmatprep.mubr.f32.mxu0 0.0
      %459 = vmatmul.mubr.f32.gmra.mxu0 %v265
      %v460 = vpop.f32.mrf.mxu0
      %v461 = vadd.f32 0.0, %v460
      %v462 = vpop.f32.mrf.mxu0
      %v463 = vadd.f32 0.0, %v462
      %464 = vmatprep.mubr.f32.mxu0 0.0
      %465 = vmatmul.mubr.f32.gmra.mxu0 %v266
      %v466 = vpop.f32.mrf.mxu0
      %v467 = vadd.f32 0.0, %v466
      %v468 = vpop.f32.mrf.mxu0
      %v469 = vadd.f32 0.0, %v468
      %470 = vmatprep.mubr.f32.mxu0 0.0
      %471 = vmatmul.mubr.f32.gmra.mxu0 %v267
      %v472 = vpop.f32.mrf.mxu0
      %v473 = vadd.f32 0.0, %v472
      %v474 = vpop.f32.mrf.mxu0
      %v475 = vadd.f32 0.0, %v474
      %476 = vdwg.mxu0
      %v477 = vstv %s251
      %v478 = vmul.f32 %v383, %v477
      %v479 = vmul.f32 %v385, %v477
      %v480 = vmul.f32 %v389, %v477
      %v481 = vmul.f32 %v391, %v477
      %v482 = vmul.f32 %v395, %v477
      %v483 = vmul.f32 %v397, %v477
      %v484 = vmul.f32 %v401, %v477
      %v485 = vmul.f32 %v403, %v477
      %v486 = vmul.f32 %v407, %v477
      %v487 = vmul.f32 %v409, %v477
      %v488 = vmul.f32 %v413, %v477
      %v489 = vmul.f32 %v415, %v477
      %v490 = vmul.f32 %v419, %v477
      %v491 = vmul.f32 %v421, %v477
      %v492 = vmul.f32 %v425, %v477
      %v493 = vmul.f32 %v427, %v477
      %v494 = vmul.f32 %v431, %v477
      %v495 = vmul.f32 %v433, %v477
      %v496 = vmul.f32 %v437, %v477
      %v497 = vmul.f32 %v439, %v477
      %v498 = vmul.f32 %v443, %v477
      %v499 = vmul.f32 %v445, %v477
      %v500 = vmul.f32 %v449, %v477
      %v501 = vmul.f32 %v451, %v477
      %v502 = vmul.f32 %v455, %v477
      %v503 = vmul.f32 %v457, %v477
      %v504 = vmul.f32 %v461, %v477
      %v505 = vmul.f32 %v463, %v477
      %v506 = vmul.f32 %v467, %v477
      %v507 = vmul.f32 %v469, %v477
      %v508 = vmul.f32 %v473, %v477
      %v509 = vmul.f32 %v475, %v477
      %v510 = vld [vmem:[%s4] sm:$0xff]
      %v511 = vld [vmem:[%s4 + $0x8] sm:$0xff]
      %v512 = vld [vmem:[%s4 + $0x10] sm:$0xff]
      %v513 = vld [vmem:[%s4 + $0x18] sm:$0xff]
      %v514 = vld [vmem:[%s4 + $0x20] sm:$0xff]
      %v515 = vld [vmem:[%s4 + $0x28] sm:$0xff]
      %v516 = vld [vmem:[%s4 + $0x30] sm:$0xff]
      %v517 = vld [vmem:[%s4 + $0x38] sm:$0xff]
      %v518 = vld [vmem:[%s4 + $0x40] sm:$0xff]
      %v519 = vld [vmem:[%s4 + $0x48] sm:$0xff]
      %v520 = vld [vmem:[%s4 + $0x50] sm:$0xff]
      %v521 = vld [vmem:[%s4 + $0x58] sm:$0xff]
      %v522 = vld [vmem:[%s4 + $0x60] sm:$0xff]
      %v523 = vld [vmem:[%s4 + $0x68] sm:$0xff]
      %v524 = vld [vmem:[%s4 + $0x70] sm:$0xff]
      %v525 = vld [vmem:[%s4 + $0x78] sm:$0xff]
      %v526 = vld [vmem:[%s4 + $0x80] sm:$0xff]
      %v527 = vld [vmem:[%s4 + $0x88] sm:$0xff]
      %v528 = vld [vmem:[%s4 + $0x90] sm:$0xff]
      %v529 = vld [vmem:[%s4 + $0x98] sm:$0xff]
      %v530 = vld [vmem:[%s4 + $0xa0] sm:$0xff]
      %v531 = vld [vmem:[%s4 + $0xa8] sm:$0xff]
      %v532 = vld [vmem:[%s4 + $0xb0] sm:$0xff]
      %v533 = vld [vmem:[%s4 + $0xb8] sm:$0xff]
      %v534 = vld [vmem:[%s4 + $0xc0] sm:$0xff]
      %v535 = vld [vmem:[%s4 + $0xc8] sm:$0xff]
      %v536 = vld [vmem:[%s4 + $0xd0] sm:$0xff]
      %v537 = vld [vmem:[%s4 + $0xd8] sm:$0xff]
      %v538 = vld [vmem:[%s4 + $0xe0] sm:$0xff]
      %v539 = vld [vmem:[%s4 + $0xe8] sm:$0xff]
      %v540 = vld [vmem:[%s4 + $0xf0] sm:$0xff]
      %v541 = vld [vmem:[%s4 + $0xf8] sm:$0xff]
      %542 = vmatprep.subr.mxu0 %v541
      %543 = vmatpush1.msra.mxu0 %v540
      %544 = vmatprep.subr.mxu0 %v539
      %545 = vmatpush1.msra.mxu0 %v538
      %546 = vmatprep.subr.mxu0 %v537
      %547 = vmatpush1.msra.mxu0 %v536
      %548 = vmatprep.subr.mxu0 %v535
      %549 = vmatpush1.msra.mxu0 %v534
      %550 = vmatprep.subr.mxu0 %v533
      %551 = vmatpush1.msra.mxu0 %v532
      %552 = vmatprep.subr.mxu0 %v531
      %553 = vmatpush1.msra.mxu0 %v530
      %554 = vmatprep.subr.mxu0 %v529
      %555 = vmatpush1.msra.mxu0 %v528
      %556 = vmatprep.subr.mxu0 %v527
      %557 = vmatpush1.msra.mxu0 %v526
      %558 = vmatprep.subr.mxu0 %v525
      %559 = vmatpush1.msra.mxu0 %v524
      %560 = vmatprep.subr.mxu0 %v523
      %561 = vmatpush1.msra.mxu0 %v522
      %562 = vmatprep.subr.mxu0 %v521
      %563 = vmatpush1.msra.mxu0 %v520
      %564 = vmatprep.subr.mxu0 %v519
      %565 = vmatpush1.msra.mxu0 %v518
      %566 = vmatprep.subr.mxu0 %v517
      %567 = vmatpush1.msra.mxu0 %v516
      %568 = vmatprep.subr.mxu0 %v515
      %569 = vmatpush1.msra.mxu0 %v514
      %570 = vmatprep.subr.mxu0 %v513
      %571 = vmatpush1.msra.mxu0 %v512
      %572 = vmatprep.subr.mxu0 %v511
      %573 = vmatpush1.msra.mxu0 %v510
      %574 = vmatprep.subr.mxu0 0.0
      %575 = vmatpush2.msra.mxu0 0.0
      %576 = vmatprep.subr.mxu0 0.0
      %577 = vmatpush2.msra.mxu0 0.0
      %578 = vmatprep.subr.mxu0 0.0
      %579 = vmatpush2.msra.mxu0 0.0
      %580 = vmatprep.subr.mxu0 0.0
      %581 = vmatpush2.msra.mxu0 0.0
      %582 = vmatprep.subr.mxu0 0.0
      %583 = vmatpush2.msra.mxu0 0.0
      %584 = vmatprep.subr.mxu0 0.0
      %585 = vmatpush2.msra.mxu0 0.0
      %586 = vmatprep.subr.mxu0 0.0
      %587 = vmatpush2.msra.mxu0 0.0
      %588 = vmatprep.subr.mxu0 0.0
      %589 = vmatpush2.msra.mxu0 0.0
      %590 = vmatprep.subr.mxu0 0.0
      %591 = vmatpush2.msra.mxu0 0.0
      %592 = vmatprep.subr.mxu0 0.0
      %593 = vmatpush2.msra.mxu0 0.0
      %594 = vmatprep.subr.mxu0 0.0
      %595 = vmatpush2.msra.mxu0 0.0
      %596 = vmatprep.subr.mxu0 0.0
      %597 = vmatpush2.msra.mxu0 0.0
      %598 = vmatprep.subr.mxu0 0.0
      %599 = vmatpush2.msra.mxu0 0.0
      %600 = vmatprep.subr.mxu0 0.0
      %601 = vmatpush2.msra.mxu0 0.0
      %602 = vmatprep.subr.mxu0 0.0
      %603 = vmatpush2.msra.mxu0 0.0
      %604 = vmatprep.subr.mxu0 0.0
      %605 = vmatpush2.msra.mxu0 0.0
      %606 = vmatprep.mubr.f32.mxu0 0.0
      %607 = vmatmul.mubr.f32.gmra.mxu0 %v268
      %v608 = vpop.f32.mrf.mxu0
      %v609 = vadd.f32 0.0, %v608
      %v610 = vpop.f32.mrf.mxu0
      %v611 = vadd.f32 0.0, %v610
      %612 = vmatprep.mubr.f32.mxu0 0.0
      %613 = vmatmul.mubr.f32.gmra.mxu0 %v269
      %v614 = vpop.f32.mrf.mxu0
      %v615 = vadd.f32 0.0, %v614
      %v616 = vpop.f32.mrf.mxu0
      %v617 = vadd.f32 0.0, %v616
      %618 = vmatprep.mubr.f32.mxu0 0.0
      %619 = vmatmul.mubr.f32.gmra.mxu0 %v270
      %v620 = vpop.f32.mrf.mxu0
      %v621 = vadd.f32 0.0, %v620
      %v622 = vpop.f32.mrf.mxu0
      %v623 = vadd.f32 0.0, %v622
      %624 = vmatprep.mubr.f32.mxu0 0.0
      %625 = vmatmul.mubr.f32.gmra.mxu0 %v271
      %v626 = vpop.f32.mrf.mxu0
      %v627 = vadd.f32 0.0, %v626
      %v628 = vpop.f32.mrf.mxu0
      %v629 = vadd.f32 0.0, %v628
      %630 = vmatprep.mubr.f32.mxu0 0.0
      %631 = vmatmul.mubr.f32.gmra.mxu0 %v272
      %v632 = vpop.f32.mrf.mxu0
      %v633 = vadd.f32 0.0, %v632
      %v634 = vpop.f32.mrf.mxu0
      %v635 = vadd.f32 0.0, %v634
      %636 = vmatprep.mubr.f32.mxu0 0.0
      %637 = vmatmul.mubr.f32.gmra.mxu0 %v273
      %v638 = vpop.f32.mrf.mxu0
      %v639 = vadd.f32 0.0, %v638
      %v640 = vpop.f32.mrf.mxu0
      %v641 = vadd.f32 0.0, %v640
      %642 = vmatprep.mubr.f32.mxu0 0.0
      %643 = vmatmul.mubr.f32.gmra.mxu0 %v274
      %v644 = vpop.f32.mrf.mxu0
      %v645 = vadd.f32 0.0, %v644
      %v646 = vpop.f32.mrf.mxu0
      %v647 = vadd.f32 0.0, %v646
      %648 = vmatprep.mubr.f32.mxu0 0.0
      %649 = vmatmul.mubr.f32.gmra.mxu0 %v275
      %v650 = vpop.f32.mrf.mxu0
      %v651 = vadd.f32 0.0, %v650
      %v652 = vpop.f32.mrf.mxu0
      %v653 = vadd.f32 0.0, %v652
      %654 = vmatprep.mubr.f32.mxu0 0.0
      %655 = vmatmul.mubr.f32.gmra.mxu0 %v276
      %v656 = vpop.f32.mrf.mxu0
      %v657 = vadd.f32 0.0, %v656
      %v658 = vpop.f32.mrf.mxu0
      %v659 = vadd.f32 0.0, %v658
      %660 = vmatprep.mubr.f32.mxu0 0.0
      %661 = vmatmul.mubr.f32.gmra.mxu0 %v277
      %v662 = vpop.f32.mrf.mxu0
      %v663 = vadd.f32 0.0, %v662
      %v664 = vpop.f32.mrf.mxu0
      %v665 = vadd.f32 0.0, %v664
      %666 = vmatprep.mubr.f32.mxu0 0.0
      %667 = vmatmul.mubr.f32.gmra.mxu0 %v278
      %v668 = vpop.f32.mrf.mxu0
      %v669 = vadd.f32 0.0, %v668
      %v670 = vpop.f32.mrf.mxu0
      %v671 = vadd.f32 0.0, %v670
      %672 = vmatprep.mubr.f32.mxu0 0.0
      %673 = vmatmul.mubr.f32.gmra.mxu0 %v279
      %v674 = vpop.f32.mrf.mxu0
      %v675 = vadd.f32 0.0, %v674
      %v676 = vpop.f32.mrf.mxu0
      %v677 = vadd.f32 0.0, %v676
      %678 = vmatprep.mubr.f32.mxu0 0.0
      %679 = vmatmul.mubr.f32.gmra.mxu0 %v280
      %v680 = vpop.f32.mrf.mxu0
      %v681 = vadd.f32 0.0, %v680
      %v682 = vpop.f32.mrf.mxu0
      %v683 = vadd.f32 0.0, %v682
      %684 = vmatprep.mubr.f32.mxu0 0.0
      %685 = vmatmul.mubr.f32.gmra.mxu0 %v281
      %v686 = vpop.f32.mrf.mxu0
      %v687 = vadd.f32 0.0, %v686
      %v688 = vpop.f32.mrf.mxu0
      %v689 = vadd.f32 0.0, %v688
      %690 = vmatprep.mubr.f32.mxu0 0.0
      %691 = vmatmul.mubr.f32.gmra.mxu0 %v282
      %v692 = vpop.f32.mrf.mxu0
      %v693 = vadd.f32 0.0, %v692
      %v694 = vpop.f32.mrf.mxu0
      %v695 = vadd.f32 0.0, %v694
      %696 = vmatprep.mubr.f32.mxu0 0.0
      %697 = vmatmul.mubr.f32.gmra.mxu0 %v283
      %v698 = vpop.f32.mrf.mxu0
      %v699 = vadd.f32 0.0, %v698
      %v700 = vpop.f32.mrf.mxu0
      %v701 = vadd.f32 0.0, %v700
      %702 = vdwg.mxu0
      %v703 = vmul.f32 %v609, %v477
      %v704 = vmul.f32 %v611, %v477
      %v705 = vmul.f32 %v615, %v477
      %v706 = vmul.f32 %v617, %v477
      %v707 = vmul.f32 %v621, %v477
      %v708 = vmul.f32 %v623, %v477
      %v709 = vmul.f32 %v627, %v477
      %v710 = vmul.f32 %v629, %v477
      %v711 = vmul.f32 %v633, %v477
      %v712 = vmul.f32 %v635, %v477
      %v713 = vmul.f32 %v639, %v477
      %v714 = vmul.f32 %v641, %v477
      %v715 = vmul.f32 %v645, %v477
      %v716 = vmul.f32 %v647, %v477
      %v717 = vmul.f32 %v651, %v477
      %v718 = vmul.f32 %v653, %v477
      %v719 = vmul.f32 %v657, %v477
      %v720 = vmul.f32 %v659, %v477
      %v721 = vmul.f32 %v663, %v477
      %v722 = vmul.f32 %v665, %v477
      %v723 = vmul.f32 %v669, %v477
      %v724 = vmul.f32 %v671, %v477
      %v725 = vmul.f32 %v675, %v477
      %v726 = vmul.f32 %v677, %v477
      %v727 = vmul.f32 %v681, %v477
      %v728 = vmul.f32 %v683, %v477
      %v729 = vmul.f32 %v687, %v477
      %v730 = vmul.f32 %v689, %v477
      %v731 = vmul.f32 %v693, %v477
      %v732 = vmul.f32 %v695, %v477
      %v733 = vmul.f32 %v699, %v477
      %v734 = vmul.f32 %v701, %v477
      %v735 = vmul.f32 %v252, %v268
      %v736 = vmul.f32 %v253, %v269
      %v737 = vmul.f32 %v254, %v270
      %v738 = vmul.f32 %v255, %v271
      %v739 = vmul.f32 %v256, %v272
      %v740 = vmul.f32 %v257, %v273
      %v741 = vmul.f32 %v258, %v274
      %v742 = vmul.f32 %v259, %v275
      %v743 = vmul.f32 %v260, %v276
      %v744 = vmul.f32 %v261, %v277
      %v745 = vmul.f32 %v262, %v278
      %v746 = vmul.f32 %v263, %v279
      %v747 = vmul.f32 %v264, %v280
      %v748 = vmul.f32 %v265, %v281
      %v749 = vmul.f32 %v266, %v282
      %v750 = vmul.f32 %v267, %v283
      %751 = vadd.xlane.f32.xlu0 %v735
      %v752 = vpop.xlane.xlu0 %751
      %753 = vadd.xlane.f32.xlu0 %v736
      %v754 = vpop.xlane.xlu0 %753
      %755 = vadd.xlane.f32.xlu0 %v737
      %v756 = vpop.xlane.xlu0 %755
      %757 = vadd.xlane.f32.xlu0 %v738
      %v758 = vpop.xlane.xlu0 %757
      %759 = vadd.xlane.f32.xlu0 %v739
      %v760 = vpop.xlane.xlu0 %759
      %761 = vadd.xlane.f32.xlu0 %v740
      %v762 = vpop.xlane.xlu0 %761
      %763 = vadd.xlane.f32.xlu0 %v741
      %v764 = vpop.xlane.xlu0 %763
      %765 = vadd.xlane.f32.xlu0 %v742
      %v766 = vpop.xlane.xlu0 %765
      %767 = vadd.xlane.f32.xlu0 %v743
      %v768 = vpop.xlane.xlu0 %767
      %769 = vadd.xlane.f32.xlu0 %v744
      %v770 = vpop.xlane.xlu0 %769
      %771 = vadd.xlane.f32.xlu0 %v745
      %v772 = vpop.xlane.xlu0 %771
      %773 = vadd.xlane.f32.xlu0 %v746
      %v774 = vpop.xlane.xlu0 %773
      %775 = vadd.xlane.f32.xlu0 %v747
      %v776 = vpop.xlane.xlu0 %775
      %777 = vadd.xlane.f32.xlu0 %v748
      %v778 = vpop.xlane.xlu0 %777
      %779 = vadd.xlane.f32.xlu0 %v749
      %v780 = vpop.xlane.xlu0 %779
      %781 = vadd.xlane.f32.xlu0 %v750
      %v782 = vpop.xlane.xlu0 %781
      %v783 = vmul.f32 %v752, %v477
      %v784 = vmul.f32 %v754, %v477
      %v785 = vmul.f32 %v756, %v477
      %v786 = vmul.f32 %v758, %v477
      %v787 = vmul.f32 %v760, %v477
      %v788 = vmul.f32 %v762, %v477
      %v789 = vmul.f32 %v764, %v477
      %v790 = vmul.f32 %v766, %v477
      %v791 = vmul.f32 %v768, %v477
      %v792 = vmul.f32 %v770, %v477
      %v793 = vmul.f32 %v772, %v477
      %v794 = vmul.f32 %v774, %v477
      %v795 = vmul.f32 %v776, %v477
      %v796 = vmul.f32 %v778, %v477
      %v797 = vmul.f32 %v780, %v477
      %v798 = vmul.f32 %v782, %v477
      %v799 = vmax.f32 %v478, %v479
      %800 = vmax.xlane.f32.xlu0 %v799
      %v801 = vpop.xlane.xlu0 %800
      %v802 = vmax.f32 %v480, %v481
      %803 = vmax.xlane.f32.xlu0 %v802
      %v804 = vpop.xlane.xlu0 %803
      %v805 = vmax.f32 %v482, %v483
      %806 = vmax.xlane.f32.xlu0 %v805
      %v807 = vpop.xlane.xlu0 %806
      %v808 = vmax.f32 %v484, %v485
      %809 = vmax.xlane.f32.xlu0 %v808
      %v810 = vpop.xlane.xlu0 %809
      %v811 = vmax.f32 %v486, %v487
      %812 = vmax.xlane.f32.xlu0 %v811
      %v813 = vpop.xlane.xlu0 %812
      %v814 = vmax.f32 %v488, %v489
      %815 = vmax.xlane.f32.xlu0 %v814
      %v816 = vpop.xlane.xlu0 %815
      %v817 = vmax.f32 %v490, %v491
      %818 = vmax.xlane.f32.xlu0 %v817
      %v819 = vpop.xlane.xlu0 %818
      %v820 = vmax.f32 %v492, %v493
      %821 = vmax.xlane.f32.xlu0 %v820
      %v822 = vpop.xlane.xlu0 %821
      %v823 = vmax.f32 %v494, %v495
      %824 = vmax.xlane.f32.xlu0 %v823
      %v825 = vpop.xlane.xlu0 %824
      %v826 = vmax.f32 %v496, %v497
      %827 = vmax.xlane.f32.xlu0 %v826
      %v828 = vpop.xlane.xlu0 %827
      %v829 = vmax.f32 %v498, %v499
      %830 = vmax.xlane.f32.xlu0 %v829
      %v831 = vpop.xlane.xlu0 %830
      %v832 = vmax.f32 %v500, %v501
      %833 = vmax.xlane.f32.xlu0 %v832
      %v834 = vpop.xlane.xlu0 %833
      %v835 = vmax.f32 %v502, %v503
      %836 = vmax.xlane.f32.xlu0 %v835
      %v837 = vpop.xlane.xlu0 %836
      %v838 = vmax.f32 %v504, %v505
      %839 = vmax.xlane.f32.xlu0 %v838
      %v840 = vpop.xlane.xlu0 %839
      %v841 = vmax.f32 %v506, %v507
      %842 = vmax.xlane.f32.xlu0 %v841
      %v843 = vpop.xlane.xlu0 %842
      %v844 = vmax.f32 %v508, %v509
      %845 = vmax.xlane.f32.xlu0 %v844
      %v846 = vpop.xlane.xlu0 %845
      %v847 = vsub.f32 %v478, %v801
      %v848 = vsub.f32 %v479, %v801
      %v849 = vsub.f32 %v480, %v804
      %v850 = vsub.f32 %v481, %v804
      %v851 = vsub.f32 %v482, %v807
      %v852 = vsub.f32 %v483, %v807
      %v853 = vsub.f32 %v484, %v810
      %v854 = vsub.f32 %v485, %v810
      %v855 = vsub.f32 %v486, %v813
      %v856 = vsub.f32 %v487, %v813
      %v857 = vsub.f32 %v488, %v816
      %v858 = vsub.f32 %v489, %v816
      %v859 = vsub.f32 %v490, %v819
      %v860 = vsub.f32 %v491, %v819
      %v861 = vsub.f32 %v492, %v822
      %v862 = vsub.f32 %v493, %v822
      %v863 = vsub.f32 %v494, %v825
      %v864 = vsub.f32 %v495, %v825
      %v865 = vsub.f32 %v496, %v828
      %v866 = vsub.f32 %v497, %v828
      %v867 = vsub.f32 %v498, %v831
      %v868 = vsub.f32 %v499, %v831
      %v869 = vsub.f32 %v500, %v834
      %v870 = vsub.f32 %v501, %v834
      %v871 = vsub.f32 %v502, %v837
      %v872 = vsub.f32 %v503, %v837
      %v873 = vsub.f32 %v504, %v840
      %v874 = vsub.f32 %v505, %v840
      %v875 = vsub.f32 %v506, %v843
      %v876 = vsub.f32 %v507, %v843
      %v877 = vsub.f32 %v508, %v846
      %v878 = vsub.f32 %v509, %v846
      %v879 = vmul.f32 %v847, 1.442695
      %v880 = vpow.pop %v879
      %v881 = vmul.f32 %v848, 1.442695
      %v882 = vpow.pop %v881
      %v883 = vmul.f32 %v849, 1.442695
      %v884 = vpow.pop %v883
      %v885 = vmul.f32 %v850, 1.442695
      %v886 = vpow.pop %v885
      %v887 = vmul.f32 %v851, 1.442695
      %v888 = vpow.pop %v887
      %v889 = vmul.f32 %v852, 1.442695
      %v890 = vpow.pop %v889
      %v891 = vmul.f32 %v853, 1.442695
      %v892 = vpow.pop %v891
      %v893 = vmul.f32 %v854, 1.442695
      %v894 = vpow.pop %v893
      %v895 = vmul.f32 %v855, 1.442695
      %v896 = vpow.pop %v895
      %v897 = vmul.f32 %v856, 1.442695
      %v898 = vpow.pop %v897
      %v899 = vmul.f32 %v857, 1.442695
      %v900 = vpow.pop %v899
      %v901 = vmul.f32 %v858, 1.442695
      %v902 = vpow.pop %v901
      %v903 = vmul.f32 %v859, 1.442695
      %v904 = vpow.pop %v903
      %v905 = vmul.f32 %v860, 1.442695
      %v906 = vpow.pop %v905
      %v907 = vmul.f32 %v861, 1.442695
      %v908 = vpow.pop %v907
      %v909 = vmul.f32 %v862, 1.442695
      %v910 = vpow.pop %v909
      %v911 = vmul.f32 %v863, 1.442695
      %v912 = vpow.pop %v911
      %v913 = vmul.f32 %v864, 1.442695
      %v914 = vpow.pop %v913
      %v915 = vmul.f32 %v865, 1.442695
      %v916 = vpow.pop %v915
      %v917 = vmul.f32 %v866, 1.442695
      %v918 = vpow.pop %v917
      %v919 = vmul.f32 %v867, 1.442695
      %v920 = vpow.pop %v919
      %v921 = vmul.f32 %v868, 1.442695
      %v922 = vpow.pop %v921
      %v923 = vmul.f32 %v869, 1.442695
      %v924 = vpow.pop %v923
      %v925 = vmul.f32 %v870, 1.442695
      %v926 = vpow.pop %v925
      %v927 = vmul.f32 %v871, 1.442695
      %v928 = vpow.pop %v927
      %v929 = vmul.f32 %v872, 1.442695
      %v930 = vpow.pop %v929
      %v931 = vmul.f32 %v873, 1.442695
      %v932 = vpow.pop %v931
      %v933 = vmul.f32 %v874, 1.442695
      %v934 = vpow.pop %v933
      %v935 = vmul.f32 %v875, 1.442695
      %v936 = vpow.pop %v935
      %v937 = vmul.f32 %v876, 1.442695
      %v938 = vpow.pop %v937
      %v939 = vmul.f32 %v877, 1.442695
      %v940 = vpow.pop %v939
      %v941 = vmul.f32 %v878, 1.442695
      %v942 = vpow.pop %v941
      %v943 = vadd.f32 %v880, %v882
      %944 = vadd.xlane.f32.xlu0 %v943
      %v945 = vpop.xlane.xlu0 %944
      %v946 = vadd.f32 %v884, %v886
      %947 = vadd.xlane.f32.xlu0 %v946
      %v948 = vpop.xlane.xlu0 %947
      %v949 = vadd.f32 %v888, %v890
      %950 = vadd.xlane.f32.xlu0 %v949
      %v951 = vpop.xlane.xlu0 %950
      %v952 = vadd.f32 %v892, %v894
      %953 = vadd.xlane.f32.xlu0 %v952
      %v954 = vpop.xlane.xlu0 %953
      %v955 = vadd.f32 %v896, %v898
      %956 = vadd.xlane.f32.xlu0 %v955
      %v957 = vpop.xlane.xlu0 %956
      %v958 = vadd.f32 %v900, %v902
      %959 = vadd.xlane.f32.xlu0 %v958
      %v960 = vpop.xlane.xlu0 %959
      %v961 = vadd.f32 %v904, %v906
      %962 = vadd.xlane.f32.xlu0 %v961
      %v963 = vpop.xlane.xlu0 %962
      %v964 = vadd.f32 %v908, %v910
      %965 = vadd.xlane.f32.xlu0 %v964
      %v966 = vpop.xlane.xlu0 %965
      %v967 = vadd.f32 %v912, %v914
      %968 = vadd.xlane.f32.xlu0 %v967
      %v969 = vpop.xlane.xlu0 %968
      %v970 = vadd.f32 %v916, %v918
      %971 = vadd.xlane.f32.xlu0 %v970
      %v972 = vpop.xlane.xlu0 %971
      %v973 = vadd.f32 %v920, %v922
      %974 = vadd.xlane.f32.xlu0 %v973
      %v975 = vpop.xlane.xlu0 %974
      %v976 = vadd.f32 %v924, %v926
      %977 = vadd.xlane.f32.xlu0 %v976
      %v978 = vpop.xlane.xlu0 %977
      %v979 = vadd.f32 %v928, %v930
      %980 = vadd.xlane.f32.xlu0 %v979
      %v981 = vpop.xlane.xlu0 %980
      %v982 = vadd.f32 %v932, %v934
      %983 = vadd.xlane.f32.xlu0 %v982
      %v984 = vpop.xlane.xlu0 %983
      %v985 = vadd.f32 %v936, %v938
      %986 = vadd.xlane.f32.xlu0 %v985
      %v987 = vpop.xlane.xlu0 %986
      %v988 = vadd.f32 %v940, %v942
      %989 = vadd.xlane.f32.xlu0 %v988
      %v990 = vpop.xlane.xlu0 %989
      %v991 = vlog2.pop %v945
      %v992 = vmul.f32 %v991, 0.6931472
      %v993 = vlog2.pop %v948
      %v994 = vmul.f32 %v993, 0.6931472
      %v995 = vlog2.pop %v951
      %v996 = vmul.f32 %v995, 0.6931472
      %v997 = vlog2.pop %v954
      %v998 = vmul.f32 %v997, 0.6931472
      %v999 = vlog2.pop %v957
      %v1000 = vmul.f32 %v999, 0.6931472
      %v1001 = vlog2.pop %v960
      %v1002 = vmul.f32 %v1001, 0.6931472
      %v1003 = vlog2.pop %v963
      %v1004 = vmul.f32 %v1003, 0.6931472
      %v1005 = vlog2.pop %v966
      %v1006 = vmul.f32 %v1005, 0.6931472
      %v1007 = vlog2.pop %v969
      %v1008 = vmul.f32 %v1007, 0.6931472
      %v1009 = vlog2.pop %v972
      %v1010 = vmul.f32 %v1009, 0.6931472
      %v1011 = vlog2.pop %v975
      %v1012 = vmul.f32 %v1011, 0.6931472
      %v1013 = vlog2.pop %v978
      %v1014 = vmul.f32 %v1013, 0.6931472
      %v1015 = vlog2.pop %v981
      %v1016 = vmul.f32 %v1015, 0.6931472
      %v1017 = vlog2.pop %v984
      %v1018 = vmul.f32 %v1017, 0.6931472
      %v1019 = vlog2.pop %v987
      %v1020 = vmul.f32 %v1019, 0.6931472
      %v1021 = vlog2.pop %v990
      %v1022 = vmul.f32 %v1021, 0.6931472
      %v1023 = vadd.f32 %v801, %v992
      %v1024 = vadd.f32 %v804, %v994
      %v1025 = vadd.f32 %v807, %v996
      %v1026 = vadd.f32 %v810, %v998
      %v1027 = vadd.f32 %v813, %v1000
      %v1028 = vadd.f32 %v816, %v1002
      %v1029 = vadd.f32 %v819, %v1004
      %v1030 = vadd.f32 %v822, %v1006
      %v1031 = vadd.f32 %v825, %v1008
      %v1032 = vadd.f32 %v828, %v1010
      %v1033 = vadd.f32 %v831, %v1012
      %v1034 = vadd.f32 %v834, %v1014
      %v1035 = vadd.f32 %v837, %v1016
      %v1036 = vadd.f32 %v840, %v1018
      %v1037 = vadd.f32 %v843, %v1020
      %v1038 = vadd.f32 %v846, %v1022
      %v1039 = vmax.f32 %v703, %v704
      %1040 = vmax.xlane.f32.xlu0 %v1039
      %v1041 = vpop.xlane.xlu0 %1040
      %v1042 = vmax.f32 %v705, %v706
      %1043 = vmax.xlane.f32.xlu0 %v1042
      %v1044 = vpop.xlane.xlu0 %1043
      %v1045 = vmax.f32 %v707, %v708
      %1046 = vmax.xlane.f32.xlu0 %v1045
      %v1047 = vpop.xlane.xlu0 %1046
      %v1048 = vmax.f32 %v709, %v710
      %1049 = vmax.xlane.f32.xlu0 %v1048
      %v1050 = vpop.xlane.xlu0 %1049
      %v1051 = vmax.f32 %v711, %v712
      %1052 = vmax.xlane.f32.xlu0 %v1051
      %v1053 = vpop.xlane.xlu0 %1052
      %v1054 = vmax.f32 %v713, %v714
      %1055 = vmax.xlane.f32.xlu0 %v1054
      %v1056 = vpop.xlane.xlu0 %1055
      %v1057 = vmax.f32 %v715, %v716
      %1058 = vmax.xlane.f32.xlu0 %v1057
      %v1059 = vpop.xlane.xlu0 %1058
      %v1060 = vmax.f32 %v717, %v718
      %1061 = vmax.xlane.f32.xlu0 %v1060
      %v1062 = vpop.xlane.xlu0 %1061
      %v1063 = vmax.f32 %v719, %v720
      %1064 = vmax.xlane.f32.xlu0 %v1063
      %v1065 = vpop.xlane.xlu0 %1064
      %v1066 = vmax.f32 %v721, %v722
      %1067 = vmax.xlane.f32.xlu0 %v1066
      %v1068 = vpop.xlane.xlu0 %1067
      %v1069 = vmax.f32 %v723, %v724
      %1070 = vmax.xlane.f32.xlu0 %v1069
      %v1071 = vpop.xlane.xlu0 %1070
      %v1072 = vmax.f32 %v725, %v726
      %1073 = vmax.xlane.f32.xlu0 %v1072
      %v1074 = vpop.xlane.xlu0 %1073
      %v1075 = vmax.f32 %v727, %v728
      %1076 = vmax.xlane.f32.xlu0 %v1075
      %v1077 = vpop.xlane.xlu0 %1076
      %v1078 = vmax.f32 %v729, %v730
      %1079 = vmax.xlane.f32.xlu0 %v1078
      %v1080 = vpop.xlane.xlu0 %1079
      %v1081 = vmax.f32 %v731, %v732
      %1082 = vmax.xlane.f32.xlu0 %v1081
      %v1083 = vpop.xlane.xlu0 %1082
      %v1084 = vmax.f32 %v733, %v734
      %1085 = vmax.xlane.f32.xlu0 %v1084
      %v1086 = vpop.xlane.xlu0 %1085
      %v1087 = vsub.f32 %v703, %v1041
      %v1088 = vsub.f32 %v704, %v1041
      %v1089 = vsub.f32 %v705, %v1044
      %v1090 = vsub.f32 %v706, %v1044
      %v1091 = vsub.f32 %v707, %v1047
      %v1092 = vsub.f32 %v708, %v1047
      %v1093 = vsub.f32 %v709, %v1050
      %v1094 = vsub.f32 %v710, %v1050
      %v1095 = vsub.f32 %v711, %v1053
      %v1096 = vsub.f32 %v712, %v1053
      %v1097 = vsub.f32 %v713, %v1056
      %v1098 = vsub.f32 %v714, %v1056
      %v1099 = vsub.f32 %v715, %v1059
      %v1100 = vsub.f32 %v716, %v1059
      %v1101 = vsub.f32 %v717, %v1062
      %v1102 = vsub.f32 %v718, %v1062
      %v1103 = vsub.f32 %v719, %v1065
      %v1104 = vsub.f32 %v720, %v1065
      %v1105 = vsub.f32 %v721, %v1068
      %v1106 = vsub.f32 %v722, %v1068
      %v1107 = vsub.f32 %v723, %v1071
      %v1108 = vsub.f32 %v724, %v1071
      %v1109 = vsub.f32 %v725, %v1074
      %v1110 = vsub.f32 %v726, %v1074
      %v1111 = vsub.f32 %v727, %v1077
      %v1112 = vsub.f32 %v728, %v1077
      %v1113 = vsub.f32 %v729, %v1080
      %v1114 = vsub.f32 %v730, %v1080
      %v1115 = vsub.f32 %v731, %v1083
      %v1116 = vsub.f32 %v732, %v1083
      %v1117 = vsub.f32 %v733, %v1086
      %v1118 = vsub.f32 %v734, %v1086
      %v1119 = vmul.f32 %v1087, 1.442695
      %v1120 = vpow.pop %v1119
      %v1121 = vmul.f32 %v1088, 1.442695
      %v1122 = vpow.pop %v1121
      %v1123 = vmul.f32 %v1089, 1.442695
      %v1124 = vpow.pop %v1123
      %v1125 = vmul.f32 %v1090, 1.442695
      %v1126 = vpow.pop %v1125
      %v1127 = vmul.f32 %v1091, 1.442695
      %v1128 = vpow.pop %v1127
      %v1129 = vmul.f32 %v1092, 1.442695
      %v1130 = vpow.pop %v1129
      %v1131 = vmul.f32 %v1093, 1.442695
      %v1132 = vpow.pop %v1131
      %v1133 = vmul.f32 %v1094, 1.442695
      %v1134 = vpow.pop %v1133
      %v1135 = vmul.f32 %v1095, 1.442695
      %v1136 = vpow.pop %v1135
      %v1137 = vmul.f32 %v1096, 1.442695
      %v1138 = vpow.pop %v1137
      %v1139 = vmul.f32 %v1097, 1.442695
      %v1140 = vpow.pop %v1139
      %v1141 = vmul.f32 %v1098, 1.442695
      %v1142 = vpow.pop %v1141
      %v1143 = vmul.f32 %v1099, 1.442695
      %v1144 = vpow.pop %v1143
      %v1145 = vmul.f32 %v1100, 1.442695
      %v1146 = vpow.pop %v1145
      %v1147 = vmul.f32 %v1101, 1.442695
      %v1148 = vpow.pop %v1147
      %v1149 = vmul.f32 %v1102, 1.442695
      %v1150 = vpow.pop %v1149
      %v1151 = vmul.f32 %v1103, 1.442695
      %v1152 = vpow.pop %v1151
      %v1153 = vmul.f32 %v1104, 1.442695
      %v1154 = vpow.pop %v1153
      %v1155 = vmul.f32 %v1105, 1.442695
      %v1156 = vpow.pop %v1155
      %v1157 = vmul.f32 %v1106, 1.442695
      %v1158 = vpow.pop %v1157
      %v1159 = vmul.f32 %v1107, 1.442695
      %v1160 = vpow.pop %v1159
      %v1161 = vmul.f32 %v1108, 1.442695
      %v1162 = vpow.pop %v1161
      %v1163 = vmul.f32 %v1109, 1.442695
      %v1164 = vpow.pop %v1163
      %v1165 = vmul.f32 %v1110, 1.442695
      %v1166 = vpow.pop %v1165
      %v1167 = vmul.f32 %v1111, 1.442695
      %v1168 = vpow.pop %v1167
      %v1169 = vmul.f32 %v1112, 1.442695
      %v1170 = vpow.pop %v1169
      %v1171 = vmul.f32 %v1113, 1.442695
      %v1172 = vpow.pop %v1171
      %v1173 = vmul.f32 %v1114, 1.442695
      %v1174 = vpow.pop %v1173
      %v1175 = vmul.f32 %v1115, 1.442695
      %v1176 = vpow.pop %v1175
      %v1177 = vmul.f32 %v1116, 1.442695
      %v1178 = vpow.pop %v1177
      %v1179 = vmul.f32 %v1117, 1.442695
      %v1180 = vpow.pop %v1179
      %v1181 = vmul.f32 %v1118, 1.442695
      %v1182 = vpow.pop %v1181
      %v1183 = vadd.f32 %v1120, %v1122
      %1184 = vadd.xlane.f32.xlu0 %v1183
      %v1185 = vpop.xlane.xlu0 %1184
      %v1186 = vadd.f32 %v1124, %v1126
      %1187 = vadd.xlane.f32.xlu0 %v1186
      %v1188 = vpop.xlane.xlu0 %1187
      %v1189 = vadd.f32 %v1128, %v1130
      %1190 = vadd.xlane.f32.xlu0 %v1189
      %v1191 = vpop.xlane.xlu0 %1190
      %v1192 = vadd.f32 %v1132, %v1134
      %1193 = vadd.xlane.f32.xlu0 %v1192
      %v1194 = vpop.xlane.xlu0 %1193
      %v1195 = vadd.f32 %v1136, %v1138
      %1196 = vadd.xlane.f32.xlu0 %v1195
      %v1197 = vpop.xlane.xlu0 %1196
      %v1198 = vadd.f32 %v1140, %v1142
      %1199 = vadd.xlane.f32.xlu0 %v1198
      %v1200 = vpop.xlane.xlu0 %1199
      %v1201 = vadd.f32 %v1144, %v1146
      %1202 = vadd.xlane.f32.xlu0 %v1201
      %v1203 = vpop.xlane.xlu0 %1202
      %v1204 = vadd.f32 %v1148, %v1150
      %1205 = vadd.xlane.f32.xlu0 %v1204
      %v1206 = vpop.xlane.xlu0 %1205
      %v1207 = vadd.f32 %v1152, %v1154
      %1208 = vadd.xlane.f32.xlu0 %v1207
      %v1209 = vpop.xlane.xlu0 %1208
      %v1210 = vadd.f32 %v1156, %v1158
      %1211 = vadd.xlane.f32.xlu0 %v1210
      %v1212 = vpop.xlane.xlu0 %1211
      %v1213 = vadd.f32 %v1160, %v1162
      %1214 = vadd.xlane.f32.xlu0 %v1213
      %v1215 = vpop.xlane.xlu0 %1214
      %v1216 = vadd.f32 %v1164, %v1166
      %1217 = vadd.xlane.f32.xlu0 %v1216
      %v1218 = vpop.xlane.xlu0 %1217
      %v1219 = vadd.f32 %v1168, %v1170
      %1220 = vadd.xlane.f32.xlu0 %v1219
      %v1221 = vpop.xlane.xlu0 %1220
      %v1222 = vadd.f32 %v1172, %v1174
      %1223 = vadd.xlane.f32.xlu0 %v1222
      %v1224 = vpop.xlane.xlu0 %1223
      %v1225 = vadd.f32 %v1176, %v1178
      %1226 = vadd.xlane.f32.xlu0 %v1225
      %v1227 = vpop.xlane.xlu0 %1226
      %v1228 = vadd.f32 %v1180, %v1182
      %1229 = vadd.xlane.f32.xlu0 %v1228
      %v1230 = vpop.xlane.xlu0 %1229
      %v1231 = vlog2.pop %v1185
      %v1232 = vmul.f32 %v1231, 0.6931472
      %v1233 = vlog2.pop %v1188
      %v1234 = vmul.f32 %v1233, 0.6931472
      %v1235 = vlog2.pop %v1191
      %v1236 = vmul.f32 %v1235, 0.6931472
      %v1237 = vlog2.pop %v1194
      %v1238 = vmul.f32 %v1237, 0.6931472
      %v1239 = vlog2.pop %v1197
      %v1240 = vmul.f32 %v1239, 0.6931472
      %v1241 = vlog2.pop %v1200
      %v1242 = vmul.f32 %v1241, 0.6931472
      %v1243 = vlog2.pop %v1203
      %v1244 = vmul.f32 %v1243, 0.6931472
      %v1245 = vlog2.pop %v1206
      %v1246 = vmul.f32 %v1245, 0.6931472
      %v1247 = vlog2.pop %v1209
      %v1248 = vmul.f32 %v1247, 0.6931472
      %v1249 = vlog2.pop %v1212
      %v1250 = vmul.f32 %v1249, 0.6931472
      %v1251 = vlog2.pop %v1215
      %v1252 = vmul.f32 %v1251, 0.6931472
      %v1253 = vlog2.pop %v1218
      %v1254 = vmul.f32 %v1253, 0.6931472
      %v1255 = vlog2.pop %v1221
      %v1256 = vmul.f32 %v1255, 0.6931472
      %v1257 = vlog2.pop %v1224
      %v1258 = vmul.f32 %v1257, 0.6931472
      %v1259 = vlog2.pop %v1227
      %v1260 = vmul.f32 %v1259, 0.6931472
      %v1261 = vlog2.pop %v1230
      %v1262 = vmul.f32 %v1261, 0.6931472
      %v1263 = vadd.f32 %v1041, %v1232
      %v1264 = vadd.f32 %v1044, %v1234
      %v1265 = vadd.f32 %v1047, %v1236
      %v1266 = vadd.f32 %v1050, %v1238
      %v1267 = vadd.f32 %v1053, %v1240
      %v1268 = vadd.f32 %v1056, %v1242
      %v1269 = vadd.f32 %v1059, %v1244
      %v1270 = vadd.f32 %v1062, %v1246
      %v1271 = vadd.f32 %v1065, %v1248
      %v1272 = vadd.f32 %v1068, %v1250
      %v1273 = vadd.f32 %v1071, %v1252
      %v1274 = vadd.f32 %v1074, %v1254
      %v1275 = vadd.f32 %v1077, %v1256
      %v1276 = vadd.f32 %v1080, %v1258
      %v1277 = vadd.f32 %v1083, %v1260
      %v1278 = vadd.f32 %v1086, %v1262
      %v1279 = vadd.f32 %v1023, %v1263
      %v1280 = vadd.f32 %v1024, %v1264
      %v1281 = vadd.f32 %v1025, %v1265
      %v1282 = vadd.f32 %v1026, %v1266
      %v1283 = vadd.f32 %v1027, %v1267
      %v1284 = vadd.f32 %v1028, %v1268
      %v1285 = vadd.f32 %v1029, %v1269
      %v1286 = vadd.f32 %v1030, %v1270
      %v1287 = vadd.f32 %v1031, %v1271
      %v1288 = vadd.f32 %v1032, %v1272
      %v1289 = vadd.f32 %v1033, %v1273
      %v1290 = vadd.f32 %v1034, %v1274
      %v1291 = vadd.f32 %v1035, %v1275
      %v1292 = vadd.f32 %v1036, %v1276
      %v1293 = vadd.f32 %v1037, %v1277
      %v1294 = vadd.f32 %v1038, %v1278
      %v1295 = vmul.f32 %v783, 2.0
      %v1296 = vmul.f32 %v784, 2.0
      %v1297 = vmul.f32 %v785, 2.0
      %v1298 = vmul.f32 %v786, 2.0
      %v1299 = vmul.f32 %v787, 2.0
      %v1300 = vmul.f32 %v788, 2.0
      %v1301 = vmul.f32 %v789, 2.0
      %v1302 = vmul.f32 %v790, 2.0
      %v1303 = vmul.f32 %v791, 2.0
      %v1304 = vmul.f32 %v792, 2.0
      %v1305 = vmul.f32 %v793, 2.0
      %v1306 = vmul.f32 %v794, 2.0
      %v1307 = vmul.f32 %v795, 2.0
      %v1308 = vmul.f32 %v796, 2.0
      %v1309 = vmul.f32 %v797, 2.0
      %v1310 = vmul.f32 %v798, 2.0
      %v1311 = vsub.f32 %v1279, %v1295
      %v1312 = vsub.f32 %v1280, %v1296
      %v1313 = vsub.f32 %v1281, %v1297
      %v1314 = vsub.f32 %v1282, %v1298
      %v1315 = vsub.f32 %v1283, %v1299
      %v1316 = vsub.f32 %v1284, %v1300
      %v1317 = vsub.f32 %v1285, %v1301
      %v1318 = vsub.f32 %v1286, %v1302
      %v1319 = vsub.f32 %v1287, %v1303
      %v1320 = vsub.f32 %v1288, %v1304
      %v1321 = vsub.f32 %v1289, %v1305
      %v1322 = vsub.f32 %v1290, %v1306
      %v1323 = vsub.f32 %v1291, %v1307
      %v1324 = vsub.f32 %v1292, %v1308
      %v1325 = vsub.f32 %v1293, %v1309
      %v1326 = vsub.f32 %v1294, %v1310
      %vm1327 = vcmask 7168
      %1328 = vst.msk [vmem:[%s249] sm:$0xff] %vm1327, %v1311
      %1329 = vst.msk [vmem:[%s249 + $0x8] sm:$0xff] %vm1327, %v1312
      %1330 = vst.msk [vmem:[%s249 + $0x10] sm:$0xff] %vm1327, %v1313
      %1331 = vst.msk [vmem:[%s249 + $0x18] sm:$0xff] %vm1327, %v1314
      %1332 = vst.msk [vmem:[%s249 + $0x20] sm:$0xff] %vm1327, %v1315
      %1333 = vst.msk [vmem:[%s249 + $0x28] sm:$0xff] %vm1327, %v1316
      %1334 = vst.msk [vmem:[%s249 + $0x30] sm:$0xff] %vm1327, %v1317
      %1335 = vst.msk [vmem:[%s249 + $0x38] sm:$0xff] %vm1327, %v1318
      %1336 = vst.msk [vmem:[%s249 + $0x40] sm:$0xff] %vm1327, %v1319
      %1337 = vst.msk [vmem:[%s249 + $0x48] sm:$0xff] %vm1327, %v1320
      %1338 = vst.msk [vmem:[%s249 + $0x50] sm:$0xff] %vm1327, %v1321
      %1339 = vst.msk [vmem:[%s249 + $0x58] sm:$0xff] %vm1327, %v1322
      %1340 = vst.msk [vmem:[%s249 + $0x60] sm:$0xff] %vm1327, %v1323
      %1341 = vst.msk [vmem:[%s249 + $0x68] sm:$0xff] %vm1327, %v1324
      %1342 = vst.msk [vmem:[%s249 + $0x70] sm:$0xff] %vm1327, %v1325
      %1343 = vst.msk [vmem:[%s249 + $0x78] sm:$0xff] %vm1327, %v1326
      %s1344 = smul.u32 16, %s17
      %p1345 = scmp.lt.s32.totalorder %s1344, 31
      %s1346 = scalar_select %p1345, %s1344, 31
      %s1347 = smul.addr %s1346, 8
      %s1348 = scalar_lea.vmem %s5, %s1347
      // Predicated region
      $region41: #{cross_entropy_criterion.1} parent=39 // pred_check
        %p1349 = pneg %p150
      $region42: #{cross_entropy_criterion.1} parent=39 // pred_check_branch
        %1351 = sbr.rel (%p1349) target = $region44
      $region43: #{cross_entropy_criterion.1} parent=39 // pred_region
        %s1352 = smul.u32 16, %s17
      $region44: #{cross_entropy_criterion.1} parent=39 // pred_fallthru
        _
    $region40: #{cross_entropy_criterion.1} parent=5 // pred_fallthru
      _
    %p1353 = scmp.le.s32.totalorder 2, %s12
    // Predicated region
    $region45: #{cross_entropy_criterion.1} parent=5 // pred_check
      %p1354 = pneg %p1353
    $region46: #{cross_entropy_criterion.1} parent=5 // pred_check_branch
      %1356 = sbr.rel (%p1354) target = $region48
    $region47: #{cross_entropy_criterion.1} parent=5 // pred_region
      %s1357 = ssub.s32 %s12, 2
      // Predicated region
      $region49: #{cross_entropy_criterion.1} parent=47 // pred_check
        %p1358 = pneg %p156
      $region50: #{cross_entropy_criterion.1} parent=47 // pred_check_branch
        %1360 = sbr.rel (%p1358) target = $region52
      $region51: #{cross_entropy_criterion.1} parent=47 // pred_region
        %s1361 = smul.u32 16, %s18
        %p1362 = scmp.lt.s32.totalorder %s1361, 31
        %s1363 = scalar_select %p1362, %s1361, 31
        %s1364 = smul.addr %s1363, 8
        %s1365 = scalar_lea.vmem %s5, %s1364
      $region52: #{cross_entropy_criterion.1} parent=47 // pred_fallthru
        _
    $region48: #{cross_entropy_criterion.1} parent=5 // pred_fallthru
      _
  $region6: #{cross_entropy_criterion.1} parent=0 // loop_footer
    %s16 = sadd.s32 1, %s12
  $region7: #{cross_entropy_criterion.1} parent=0 // loop_footer_branch
    %11 = sbr.rel target = $region3
  $region8: #{cross_entropy_criterion.1} parent=0 // loop_exit
    _

</llo_original>
